<compile_context>
chip_gen: v5e
topology: v5e:2x2
jax: 0.10.0
libtpu: 0.0.40
codegen_flags: <defaults>
</compile_context>

<pallas_src>
import math
import functools

import numpy as np
import jax
import jax.numpy as jnp
from jax.experimental import pallas as pl
from jax.experimental.pallas import tpu as pltpu

_LANE = 128


def _pick_tile(dim, candidates):
    """Largest candidate that evenly divides `dim`, else the full dim."""
    for c in candidates:
        if c <= dim and dim % c == 0:
            return c
    return dim


# ---------------------------------------------------------------------------
# Fused kernel: encoder GEMM (tiled over the NF reduction axis) + cluster stage
# ---------------------------------------------------------------------------
def _dec_fused_kernel(x_ref, w_ref, b_ref, ct_ref, inorm_ref,
                      assign_ref, repr_ref, acc_ref,
                      *, n_nodes, hidden, n_clusters):
    """One (batch-tile i, reduction-tile k) grid step.

    acc_ref: [tm, N*H] f32 VMEM accumulator for the encoder GEMM. On the last
    k step we add the bias and run scores -> softmax -> node_repr directly on
    the VMEM-resident activations.
    """
    k = pl.program_id(1)

    @pl.when(k == 0)
    def _init():
        acc_ref[...] = jnp.zeros_like(acc_ref)

    # Encoder GEMM partial product: bf16 inputs, f32 accumulation on the MXU.
    acc_ref[...] += jnp.dot(x_ref[...], w_ref[...],
                            preferred_element_type=jnp.float32)

    @pl.when(k == pl.num_programs(1) - 1)
    def _finalize():
        tm = acc_ref.shape[0]
        kp = ct_ref.shape[1]

        enc = acc_ref[...] + b_ref[...]                 # [tm, N*H]  f32
        # Flatten the batch tile into rows so the whole score matmul is one dot
        # over tm*N rows (lane-preserving reshape when H % 128 == 0).
        enc2 = enc.reshape(tm * n_nodes, hidden)        # [tm*N, H]

        # scores = (enc @ centers^T)^2 / ||centers||  (norm hoisted to wrapper)
        scores = jnp.dot(enc2.astype(ct_ref.dtype), ct_ref[...],
                         preferred_element_type=jnp.float32)   # [tm*N, Kp]
        scores = scores * scores * inorm_ref[...]

        # Mask padded cluster columns, then numerically-stable softmax.
        col = jax.lax.broadcasted_iota(jnp.int32, (1, kp), 1)
        scores = jnp.where(col < n_clusters, scores,
                           jnp.full_like(scores, -jnp.inf))
        scores = scores - jnp.max(scores, axis=-1, keepdims=True)
        e = jnp.exp(scores)
        # (pl.reciprocal(..., approx=True) is a further EUP micro-opt; exact
        # division kept here so the kernel matches the reference tightly.)
        assign = e / jnp.sum(e, axis=-1, keepdims=True)          # [tm*N, Kp]

        assign3 = assign.reshape(tm, n_nodes, kp)                # [tm, N, Kp]
        enc3 = enc2.reshape(tm, n_nodes, hidden)                 # [tm, N, H]

        assign_ref[...] = assign3
        # node_repr = assignment^T @ encoded, batched over the batch tile,
        # expressed as a batched einsum (no explicit transpose / XLU op).
        repr_ref[...] = jnp.einsum(
            "bnk,bnh->bkh",
            assign3.astype(jnp.bfloat16), enc3.astype(jnp.bfloat16),
            preferred_element_type=jnp.float32)


# ---------------------------------------------------------------------------
# Wrapper
# ---------------------------------------------------------------------------
def dec_forward(x, w_enc, b_enc, cluster_centers, hidden_dim,
                *, block_m=None, block_k=None, interpret=False):
    B, N, F = x.shape
    NF = N * F
    NH = N * hidden_dim
    K, H = cluster_centers.shape
    assert H == hidden_dim
    assert w_enc.shape == (NF, NH)

    # Lane-pad the cluster axis so assignment / node_repr stores are lane-dense
    # (unmasked 128-wide vst); padded columns are masked to -inf pre-softmax.
    Kp = ((K + _LANE - 1) // _LANE) * _LANE

    centers_t = jnp.zeros((H, Kp), jnp.float32).at[:, :K].set(cluster_centers.T)
    inv_norm = jnp.zeros((1, Kp), jnp.float32).at[:, :K].set(
        1.0 / jnp.linalg.norm(cluster_centers, axis=-1))

    # bf16 MXU inputs at the kernel boundary (halves HBM weight traffic);
    # accumulation stays f32 inside the kernel.
    x_flat = x.reshape(B, NF).astype(jnp.bfloat16)
    w_bf16 = w_enc.astype(jnp.bfloat16)
    ct_bf16 = centers_t.astype(jnp.bfloat16)
    b_row = b_enc.reshape(1, NH).astype(jnp.float32)

    # Tile caps sized for v7x's smaller (64 MiB phys / 32 MiB scoped) VMEM:
    # tm <= 128, tk <= 512 with double-buffered bf16 inputs stays well inside.
    tm = block_m or _pick_tile(B, (128, 64, 32, 16, 8))
    tk = block_k or _pick_tile(NF, (512, 256, 128))
    grid = (B // tm, NF // tk)

    # NOTE: the encoder output row (N*H) is kept whole per batch tile so the
    # cluster stage can run on it in VMEM; for very large N*H the cluster
    # stage itself would need an additional N-tiling pass.
    kernel = functools.partial(_dec_fused_kernel,
                               n_nodes=N, hidden=H, n_clusters=K)

    assign_pad, repr_pad = pl.pallas_call(
        kernel,
        out_shape=(
            jax.ShapeDtypeStruct((B, N, Kp), jnp.float32),   # assignment (padded)
            jax.ShapeDtypeStruct((B, Kp, H), jnp.float32),   # node_repr (padded)
        ),
        grid_spec=pltpu.PrefetchScalarGridSpec(
            num_scalar_prefetch=0,
            grid=grid,
            in_specs=[
                pl.BlockSpec((tm, tk), lambda i, k: (i, k)),     # x
                pl.BlockSpec((tk, NH), lambda i, k: (k, 0)),     # W
                pl.BlockSpec((1, NH), lambda i, k: (0, 0)),      # bias
                pl.BlockSpec((H, Kp), lambda i, k: (0, 0)),      # centers^T (padded)
                pl.BlockSpec((1, Kp), lambda i, k: (0, 0)),      # 1/||centers||
            ],
            out_specs=(
                pl.BlockSpec((tm, N, Kp), lambda i, k: (i, 0, 0)),
                pl.BlockSpec((tm, Kp, H), lambda i, k: (i, 0, 0)),
            ),
            scratch_shapes=[pltpu.VMEM((tm, NH), jnp.float32)],
        ),
        compiler_params=pltpu.CompilerParams(
            dimension_semantics=("parallel", "arbitrary")),
        interpret=interpret,
    )(x_flat, w_bf16, b_row, ct_bf16, inv_norm)

    node_repr = repr_pad[:, :K, :]
    assignment = assign_pad[:, :, :K]
    return node_repr, assignment


# ---------------------------------------------------------------------------
# Parameter initialization (deterministic, mirrors the PyTorch __init__)
# ---------------------------------------------------------------------------
def init_cluster_centers(key, cluster_number, embedding_dimension):
    # Xavier-uniform then the module's Gram-Schmidt orthogonalization
    # (orthogonal=True path; row 0 left unnormalized, as in the PyTorch code).
    bound = math.sqrt(6.0 / (cluster_number + embedding_dimension))
    init = np.array(
        jax.random.uniform(
            key, (cluster_number, embedding_dimension), jnp.float32, -bound, bound
        )
    )
    orth = np.zeros_like(init)
    orth[0] = init[0]
    for i in range(1, cluster_number):
        proj = np.zeros(embedding_dimension, dtype=np.float32)
        for j in range(i):
            proj += np.dot(init[j], init[i]) / np.dot(init[j], init[j]) * init[j]
        init[i] -= proj
        orth[i] = init[i] / np.linalg.norm(init[i])
    return jnp.asarray(orth)


def init_encoder(key, in_features, out_features):
    kw, kb = jax.random.split(key)
    bound = 1.0 / math.sqrt(in_features)
    w = jax.random.uniform(kw, (in_features, out_features), jnp.float32, -bound, bound)
    b = jax.random.uniform(kb, (out_features,), jnp.float32, -bound, bound)
    return w, b


# ---------------------------------------------------------------------------
# Pure-JAX reference (same bf16 matmul inputs so the comparison is tight)
# ---------------------------------------------------------------------------
def dec_reference(x, w_enc, b_enc, centers, hidden_dim):
    B, N, F = x.shape
    x_flat = x.reshape(B, N * F)
    enc = jnp.dot(x_flat.astype(jnp.bfloat16), w_enc.astype(jnp.bfloat16),
                  preferred_element_type=jnp.float32) + b_enc
    enc = enc.reshape(B * N, hidden_dim)
    scores = jnp.dot(enc.astype(jnp.bfloat16), centers.T.astype(jnp.bfloat16),
                     preferred_element_type=jnp.float32)
    scores = (scores * scores) / jnp.linalg.norm(centers, axis=-1)
    assign = jax.nn.softmax(scores, axis=-1)
    assign3 = assign.reshape(B, N, -1)
    enc3 = enc.reshape(B, N, hidden_dim)
    node_repr = jnp.einsum("bnk,bnh->bkh",
                           assign3.astype(jnp.bfloat16), enc3.astype(jnp.bfloat16),
                           preferred_element_type=jnp.float32)
    return node_repr, assign3


# TODO(synk): target_distribution / KLDivLoss training loss is not part of
# forward() and is left out of the kernel implementation.

if __name__ == "__main__":
    B, N, F = 2, 8, 16          # batch, nodes, per-node feature dim
    H, K = 128, 4               # hidden (embedding) dim, cluster number

    key = jax.random.PRNGKey(0)
    k_x, k_c, k_e = jax.random.split(key, 3)

    x = jax.random.normal(k_x, (B, N, F), dtype=jnp.float32)
    centers = init_cluster_centers(k_c, K, H)
    w_enc, b_enc = init_encoder(k_e, N * F, N * H)

    node_repr, assignment = dec_forward(x, w_enc, b_enc, centers, H)
    jax.block_until_ready((node_repr, assignment))

    assert node_repr.shape == (B, K, H)
    assert assignment.shape == (B, N, K)

    ref_repr, ref_assign = dec_reference(x, w_enc, b_enc, centers, H)
    # Loose-ish tolerance covers bf16 MXU inputs / minor exp-impl differences.
    np.testing.assert_allclose(np.asarray(assignment), np.asarray(ref_assign),
                               rtol=5e-3, atol=5e-3)
    np.testing.assert_allclose(np.asarray(node_repr), np.asarray(ref_repr),
                               rtol=5e-3, atol=5e-3)
    # Internal consistency: soft assignments sum to 1 over clusters.
    np.testing.assert_allclose(np.asarray(assignment).sum(-1),
                               np.ones((B, N)), rtol=0, atol=1e-4)

    print("KERNEL_OK")
</pallas_src>

<mosaic_0001>
module attributes {stable_mosaic.version = 11 : i64} {
  func.func @_dec_fused_kernel(%arg0: i32, %arg1: i32, %arg2: memref<2x128xbf16, #tpu.memory_space<vmem>>, %arg3: memref<128x1024xbf16, #tpu.memory_space<vmem>>, %arg4: memref<1x1024xf32, #tpu.memory_space<vmem>>, %arg5: memref<128x128xbf16, #tpu.memory_space<vmem>>, %arg6: memref<1x128xf32, #tpu.memory_space<vmem>>, %arg7: memref<2x8x128xf32, #tpu.memory_space<vmem>>, %arg8: memref<2x128x128xf32, #tpu.memory_space<vmem>>, %arg9: memref<2x1024xf32, #tpu.memory_space<vmem>>) attributes {dimension_semantics = [#tpu.dimension_semantics<parallel>, #tpu.dimension_semantics<arbitrary>], iteration_bounds = array<i64: 1, 1>, scalar_prefetch = 0 : i64, scratch_operands = 1 : i64, tpu.core_type = #tpu.core_type<tc>, window_params = [{transform_indices = @transform_0, window_bounds = array<i64: 2, 128>}, {transform_indices = @transform_1, window_bounds = array<i64: 128, 1024>}, {pipeline_mode = #tpu.pipeline_mode<synchronous>, transform_indices = @transform_2, window_bounds = array<i64: 1, 1024>}, {pipeline_mode = #tpu.pipeline_mode<synchronous>, transform_indices = @transform_3, window_bounds = array<i64: 128, 128>}, {pipeline_mode = #tpu.pipeline_mode<synchronous>, transform_indices = @transform_4, window_bounds = array<i64: 1, 128>}, {transform_indices = @transform_5, window_bounds = array<i64: 2, 8, 128>}, {transform_indices = @transform_6, window_bounds = array<i64: 2, 128, 128>}]} {
    %c0_i32 = arith.constant 0 : i32
    %0 = arith.cmpi eq, %arg1, %c0_i32 : i32
    %1 = arith.extui %0 : i1 to i32
    %c0_i32_0 = arith.constant 0 : i32
    %2 = arith.cmpi ne, %1, %c0_i32_0 : i32
    scf.if %2 {
      %cst_10 = arith.constant 0.000000e+00 : f32
      %12 = vector.broadcast %cst_10 : f32 to vector<2x1024xf32>
      %c0_11 = arith.constant 0 : index
      %c0_12 = arith.constant 0 : index
      %13 = vector.load %arg9[%c0_11, %c0_12] : memref<2x1024xf32, #tpu.memory_space<vmem>>, vector<2x1024xf32>
      tpu.vector_store %arg9[%c0_11, %c0_12], %12 {strides = array<i32>} : memref<2x1024xf32, #tpu.memory_space<vmem>>, vector<2x1024xf32>,
    } else {
    }
    %c0 = arith.constant 0 : index
    %c0_1 = arith.constant 0 : index
    %3 = vector.load %arg9[%c0, %c0_1] : memref<2x1024xf32, #tpu.memory_space<vmem>>, vector<2x1024xf32>
    %c0_2 = arith.constant 0 : index
    %c0_3 = arith.constant 0 : index
    %4 = vector.load %arg2[%c0_2, %c0_3] : memref<2x128xbf16, #tpu.memory_space<vmem>>, vector<2x128xbf16>
    %c0_4 = arith.constant 0 : index
    %c0_5 = arith.constant 0 : index
    %5 = vector.load %arg3[%c0_4, %c0_5] : memref<128x1024xbf16, #tpu.memory_space<vmem>>, vector<128x1024xbf16>
    %cst = arith.constant dense<0.000000e+00> : vector<2x1024xf32>
    %6 = tpu.matmul %4, %5, %cst {dimension_numbers = #tpu.dot_dimension_numbers<[1], [0], [0], [1], [0, 0, 1, 1], [], []>} : vector<2x128xbf16>, vector<128x1024xbf16>, vector<2x1024xf32> -> vector<2x1024xf32>
    %7 = arith.addf %3, %6 : vector<2x1024xf32>
    %c0_6 = arith.constant 0 : index
    %c0_7 = arith.constant 0 : index
    %8 = vector.load %arg9[%c0_6, %c0_7] : memref<2x1024xf32, #tpu.memory_space<vmem>>, vector<2x1024xf32>
    tpu.vector_store %arg9[%c0_6, %c0_7], %7 {strides = array<i32>} : memref<2x1024xf32, #tpu.memory_space<vmem>>, vector<2x1024xf32>,
    %c0_i32_8 = arith.constant 0 : i32
    %9 = arith.cmpi eq, %arg1, %c0_i32_8 : i32
    %10 = arith.extui %9 : i1 to i32
    %c0_i32_9 = arith.constant 0 : i32
    %11 = arith.cmpi ne, %10, %c0_i32_9 : i32
    scf.if %11 {
      %c0_10 = arith.constant 0 : index
      %c0_11 = arith.constant 0 : index
      %12 = vector.load %arg9[%c0_10, %c0_11] : memref<2x1024xf32, #tpu.memory_space<vmem>>, vector<2x1024xf32>
      %c0_12 = arith.constant 0 : index
      %c0_13 = arith.constant 0 : index
      %13 = vector.load %arg4[%c0_12, %c0_13] : memref<1x1024xf32, #tpu.memory_space<vmem>>, vector<1x1024xf32>
      %14 = vector.broadcast %13 : vector<1x1024xf32> to vector<2x1024xf32>
      %15 = arith.addf %12, %14 : vector<2x1024xf32>
      %16 = vector.shape_cast %15 : vector<2x1024xf32> to vector<16x128xf32>
      %17 = arith.truncf %16 : vector<16x128xf32> to vector<16x128xbf16>
      %c0_14 = arith.constant 0 : index
      %c0_15 = arith.constant 0 : index
      %18 = vector.load %arg5[%c0_14, %c0_15] : memref<128x128xbf16, #tpu.memory_space<vmem>>, vector<128x128xbf16>
      %cst_16 = arith.constant dense<0.000000e+00> : vector<16x128xf32>
      %19 = tpu.matmul %17, %18, %cst_16 {dimension_numbers = #tpu.dot_dimension_numbers<[1], [0], [0], [1], [0, 0, 1, 1], [], []>} : vector<16x128xbf16>, vector<128x128xbf16>, vector<16x128xf32> -> vector<16x128xf32>
      %20 = arith.mulf %19, %19 : vector<16x128xf32>
      %c0_17 = arith.constant 0 : index
      %c0_18 = arith.constant 0 : index
      %21 = vector.load %arg6[%c0_17, %c0_18] : memref<1x128xf32, #tpu.memory_space<vmem>>, vector<1x128xf32>
      %22 = vector.broadcast %21 : vector<1x128xf32> to vector<16x128xf32>
      %23 = arith.mulf %20, %22 : vector<16x128xf32>
      %24 = tpu.iota {dimensions = array<i32: 1>} : vector<1x128xi32>
      %c4_i32 = arith.constant 4 : i32
      %25 = vector.broadcast %c4_i32 : i32 to vector<1x128xi32>
      %26 = arith.cmpi slt, %24, %25 : vector<1x128xi32>
      %cst_19 = arith.constant 0xFF800000 : f32
      %27 = vector.broadcast %cst_19 : f32 to vector<16x128xf32>
      %28 = vector.shape_cast %26 : vector<1x128xi1> to vector<1x128xi1>
      %29 = vector.broadcast %28 : vector<1x128xi1> to vector<16x128xi1>
      %30 = arith.select %29, %23, %27 : vector<16x128xi1>, vector<16x128xf32>
      %cst_20 = arith.constant dense<0xFF800000> : vector<16xf32>
      %31 = vector.multi_reduction <maximumf>, %30, %cst_20 [1] : vector<16x128xf32> to vector<16xf32>
      %32 = vector.shape_cast %31 : vector<16xf32> to vector<16x1xf32>
      %33 = vector.broadcast %32 : vector<16x1xf32> to vector<16x128xf32>
      %34 = arith.subf %30, %33 : vector<16x128xf32>
      %35 = math.exp %34 : vector<16x128xf32>
      %cst_21 = arith.constant dense<0.000000e+00> : vector<16xf32>
      %36 = vector.multi_reduction <add>, %35, %cst_21 [1] : vector<16x128xf32> to vector<16xf32>
      %37 = vector.shape_cast %36 : vector<16xf32> to vector<16x1xf32>
      %38 = vector.broadcast %37 : vector<16x1xf32> to vector<16x128xf32>
      %39 = arith.divf %35, %38 : vector<16x128xf32>
      %40 = vector.shape_cast %39 : vector<16x128xf32> to vector<2x8x128xf32>
      %41 = vector.shape_cast %16 : vector<16x128xf32> to vector<2x8x128xf32>
      %c0_22 = arith.constant 0 : index
      %c0_23 = arith.constant 0 : index
      %c0_24 = arith.constant 0 : index
      %42 = vector.load %arg7[%c0_22, %c0_23, %c0_24] : memref<2x8x128xf32, #tpu.memory_space<vmem>>, vector<2x8x128xf32>
      tpu.vector_store %arg7[%c0_22, %c0_23, %c0_24], %40 {strides = array<i32>} : memref<2x8x128xf32, #tpu.memory_space<vmem>>, vector<2x8x128xf32>,
      %43 = arith.truncf %40 : vector<2x8x128xf32> to vector<2x8x128xbf16>
      %44 = arith.truncf %41 : vector<2x8x128xf32> to vector<2x8x128xbf16>
      "tpu.trace_start"() <{level = 10 : i32, message = "bnk,bnh->bkh"}> : () -> ()
      %cst_25 = arith.constant dense<0.000000e+00> : vector<2x128x128xf32>
      %45 = tpu.matmul %43, %44, %cst_25 {dimension_numbers = #tpu.dot_dimension_numbers<[1], [1], [2], [2], [0, 0, 0, 2, 1, 2], [0], [0]>} : vector<2x8x128xbf16>, vector<2x8x128xbf16>, vector<2x128x128xf32> -> vector<2x128x128xf32>
      "tpu.trace_stop"() : () -> ()
      %c0_26 = arith.constant 0 : index
      %c0_27 = arith.constant 0 : index
      %c0_28 = arith.constant 0 : index
      %46 = vector.load %arg8[%c0_26, %c0_27, %c0_28] : memref<2x128x128xf32, #tpu.memory_space<vmem>>, vector<2x128x128xf32>
      tpu.vector_store %arg8[%c0_26, %c0_27, %c0_28], %45 {strides = array<i32>} : memref<2x128x128xf32, #tpu.memory_space<vmem>>, vector<2x128x128xf32>,
    } else {
    }
    return
  }
  func.func @transform_0(%arg0: i32, %arg1: i32) -> (i32, i32) {
    %c0_i32 = arith.constant 0 : i32
    return %arg0, %arg1 : i32, i32
  }
  func.func @transform_1(%arg0: i32, %arg1: i32) -> (i32, i32) {
    %c0_i32 = arith.constant 0 : i32
    %c0_i32_0 = arith.constant 0 : i32
    return %arg1, %c0_i32 : i32, i32
  }
  func.func @transform_2(%arg0: i32, %arg1: i32) -> (i32, i32) {
    %c0_i32 = arith.constant 0 : i32
    %c0_i32_0 = arith.constant 0 : i32
    %c0_i32_1 = arith.constant 0 : i32
    return %c0_i32, %c0_i32_0 : i32, i32
  }
  func.func @transform_3(%arg0: i32, %arg1: i32) -> (i32, i32) {
    %c0_i32 = arith.constant 0 : i32
    %c0_i32_0 = arith.constant 0 : i32
    %c0_i32_1 = arith.constant 0 : i32
    return %c0_i32, %c0_i32_0 : i32, i32
  }
  func.func @transform_4(%arg0: i32, %arg1: i32) -> (i32, i32) {
    %c0_i32 = arith.constant 0 : i32
    %c0_i32_0 = arith.constant 0 : i32
    %c0_i32_1 = arith.constant 0 : i32
    return %c0_i32, %c0_i32_0 : i32, i32
  }
  func.func @transform_5(%arg0: i32, %arg1: i32) -> (i32, i32, i32) {
    %c0_i32 = arith.constant 0 : i32
    %c0_i32_0 = arith.constant 0 : i32
    %c0_i32_1 = arith.constant 0 : i32
    return %arg0, %c0_i32, %c0_i32_0 : i32, i32, i32
  }
  func.func @transform_6(%arg0: i32, %arg1: i32) -> (i32, i32, i32) {
    %c0_i32 = arith.constant 0 : i32
    %c0_i32_0 = arith.constant 0 : i32
    %c0_i32_1 = arith.constant 0 : i32
    return %arg0, %c0_i32, %c0_i32_0 : i32, i32, i32
  }
}

</mosaic_0001>

<llo_original>
// kernel: tpu_custom_call.1
$region0: #{tpu_custom_call.1}
  #allocation0 [shape = 'u32[]', space=smem, size = 0x4, offset = 0x4, fixed_abs, tag = 'smem constant byte address 0x4 - core index']
  #allocation1 [shape = 'u32[72,128]{1,0:T(1,128)}', space=vmem, size = 0x9000, scoped, tag = 'internal scratch']
  #allocation2 [shape = 'f32[2,1024]{1,0:T(2,128)}', space=vmem, size = 0x2000, scoped, tag = 'scratch operand']
  %s0 = inlined_call_operand.hbm [shape: bf16[2,128], index: 0, kind: input, shape index: {}]
  %s1 = inlined_call_operand.hbm [shape: bf16[128,1024], index: 1, kind: input, shape index: {}]
  %s2 = inlined_call_operand.hbm [shape: f32[1,1024], index: 2, kind: input, shape index: {}]
  %s3 = inlined_call_operand.hbm [shape: bf16[128,128], index: 3, kind: input, shape index: {}]
  %s4 = inlined_call_operand.vmem [shape: f32[1,128], index: 4, kind: input, shape index: {}]
  %s5 = inlined_call_operand.hbm [shape: f32[2,8,128], index: 5, kind: output, shape index: {0}]
  %s6 = inlined_call_operand.hbm [shape: f32[2,128,128], index: 6, kind: output, shape index: {1}]
  %7 = xla_tuple %s5, %s6
  %s8 = sld [smem:[#allocation0]]
  $region62: #{tpu_custom_call.1} parent=0
    _
  %s10 = ssub.s32 1, %s8
  %s11 = scalar_select 0, %s10, %s8
  $region1: #{tpu_custom_call.1} parent=0
    #allocation3 [shape = 'u8[512]{0}', space=vmem, size = 0x400, scoped, tag = 'input window, operand 0, single buffered']
    #allocation4 [shape = 's32[1]{0}', space=sflag, size = 0x4, scoped, tag = 'scoped memory for tpu_custom_call.1']
    #allocation5 [shape = 's32[1]{0}', space=sflag, size = 0x4, scoped, tag = 'scoped memory for tpu_custom_call.1']
    #allocation6 [shape = 'u8[262144]{0}', space=vmem, size = 0x40000, scoped, tag = 'input window, operand 1, single buffered']
    #allocation7 [shape = 's32[1]{0}', space=sflag, size = 0x4, scoped, tag = 'scoped memory for tpu_custom_call.1']
    #allocation8 [shape = 'u8[4096]{0}', space=vmem, size = 0x1000, scoped, tag = 'input window, operand 2, single buffered']
    #allocation9 [shape = 'u8[32768]{0}', space=vmem, size = 0x8000, scoped, tag = 'input window, operand 3, single buffered']
    #allocation10 [shape = 's32[1]{0}', space=sflag, size = 0x4, scoped, tag = 'scoped memory for tpu_custom_call.1']
    #allocation11 [shape = 'u8[8192]{0}', space=vmem, size = 0x2000, scoped, tag = 'output window, operand 0, single buffered']
    #allocation12 [shape = 'u8[131072]{0}', space=vmem, size = 0x20000, scoped, tag = 'output window, operand 1, single buffered']
    #allocation13 [shape = 's32[1]{0}', space=sflag, size = 0x4, scoped, tag = 'scoped memory for tpu_custom_call.1']
    %12 = vsyncpa [#allocation4], 0
    %13 = vsyncpa [#allocation7], 0
    %14 = vsyncpa [#allocation10], 0
    %15 = vsyncpa [#allocation5], 0
    %16 = vsyncpa [#allocation13], 0
    // Predicated region
    $region2: #{tpu_custom_call.1} parent=1 // pred_check
      _
    $region3: #{tpu_custom_call.1} parent=1 // pred_check_branch
      %18 = sbr.rel (0) target = $region5
    $region4: #{tpu_custom_call.1} parent=1 // pred_region
      %20 = vsyncadd [#allocation4], 0
      %s22 = sshll.u32 %s0, 4
      %s23 = int_to_ptr.hbm [resolvable:$true] %s22
      %s24 = sshll.u32 [#allocation3], 4
      %s25 = int_to_ptr.vmem [resolvable:$true] %s24
      %27 = dma.hbm_to_vmem [thread:$0]  %s23, 16, %s25, [#allocation4]
    $region5: #{tpu_custom_call.1} parent=1 // pred_fallthru
      _
    // Predicated region
    $region6: #{tpu_custom_call.1} parent=1 // pred_check
      _
    $region7: #{tpu_custom_call.1} parent=1 // pred_check_branch
      %29 = sbr.rel (0) target = $region9
    $region8: #{tpu_custom_call.1} parent=1 // pred_region
      %31 = vsyncadd [#allocation7], 0
      %s32 = sshll.u32 %s1, 4
      %s33 = int_to_ptr.hbm [resolvable:$true] %s32
      %s34 = sshll.u32 [#allocation6], 4
      %s35 = int_to_ptr.vmem [resolvable:$true] %s34
      %40 = dma.hbm_to_vmem [thread:$0]  %s33, 8192, %s35, [#allocation7], 512, 512, 32
    $region9: #{tpu_custom_call.1} parent=1 // pred_fallthru
      _
    // Predicated region
    $region10: #{tpu_custom_call.1} parent=1 // pred_check
      _
    $region11: #{tpu_custom_call.1} parent=1 // pred_check_branch
      %42 = sbr.rel (0) target = $region13
    $region12: #{tpu_custom_call.1} parent=1 // pred_region
      %44 = vsyncadd [#allocation7], 0
      %s46 = sshll.u32 %s2, 4
      %s47 = int_to_ptr.hbm [resolvable:$true] %s46
      %s48 = sshll.u32 [#allocation8], 4
      %s49 = int_to_ptr.vmem [resolvable:$true] %s48
      %51 = dma.hbm_to_vmem [thread:$0]  %s47, 128, %s49, [#allocation7]
    $region13: #{tpu_custom_call.1} parent=1 // pred_fallthru
      _
    // Predicated region
    $region14: #{tpu_custom_call.1} parent=1 // pred_check
      _
    $region15: #{tpu_custom_call.1} parent=1 // pred_check_branch
      %53 = sbr.rel (0) target = $region17
    $region16: #{tpu_custom_call.1} parent=1 // pred_region
      %55 = vsyncadd [#allocation10], 0
      %s56 = sshll.u32 %s3, 4
      %s57 = int_to_ptr.hbm [resolvable:$true] %s56
      %s58 = sshll.u32 [#allocation9], 4
      %s59 = int_to_ptr.vmem [resolvable:$true] %s58
      %64 = dma.hbm_to_vmem [thread:$0]  %s57, 1024, %s59, [#allocation10], 64, 64, 4
    $region17: #{tpu_custom_call.1} parent=1 // pred_fallthru
      _
    // Predicated region
    $region18: #{tpu_custom_call.1} parent=1 // pred_check
      _
    $region19: #{tpu_custom_call.1} parent=1 // pred_check_branch
      %66 = sbr.rel (0) target = $region21
    $region20: #{tpu_custom_call.1} parent=1 // pred_region
      _
    $region21: #{tpu_custom_call.1} parent=1 // pred_fallthru
      _
    // Predicated region
    $region22: #{tpu_custom_call.1} parent=1 // pred_check
      _
    $region23: #{tpu_custom_call.1} parent=1 // pred_check_branch
      %68 = sbr.rel (0) target = $region25
    $region24: #{tpu_custom_call.1} parent=1 // pred_region
      %70 = dma.done [#allocation4], 16
    $region25: #{tpu_custom_call.1} parent=1 // pred_fallthru
      _
    // Predicated region
    $region26: #{tpu_custom_call.1} parent=1 // pred_check
      _
    $region27: #{tpu_custom_call.1} parent=1 // pred_check_branch
      %72 = sbr.rel (0) target = $region29
    $region28: #{tpu_custom_call.1} parent=1 // pred_region
      %74 = dma.done [#allocation7], 8192
    $region29: #{tpu_custom_call.1} parent=1 // pred_fallthru
      _
    // Predicated region
    $region30: #{tpu_custom_call.1} parent=1 // pred_check
      _
    $region31: #{tpu_custom_call.1} parent=1 // pred_check_branch
      %76 = sbr.rel (0) target = $region33
    $region32: #{tpu_custom_call.1} parent=1 // pred_region
      %78 = dma.done [#allocation7], 128
    $region33: #{tpu_custom_call.1} parent=1 // pred_fallthru
      _
    // Predicated region
    $region34: #{tpu_custom_call.1} parent=1 // pred_check
      _
    $region35: #{tpu_custom_call.1} parent=1 // pred_check_branch
      %80 = sbr.rel (0) target = $region37
    $region36: #{tpu_custom_call.1} parent=1 // pred_region
      %82 = dma.done [#allocation10], 1024
    $region37: #{tpu_custom_call.1} parent=1 // pred_fallthru
      _
    %p84 = scmp.eq.s32.totalorder 0, 0
    // Predicated region
    $region38: #{tpu_custom_call.1} parent=1 // pred_check
      %p85 = pneg %p84
    $region39: #{tpu_custom_call.1} parent=1 // pred_check_branch
      %87 = sbr.rel (%p85) target = $region41
    $region40: #{tpu_custom_call.1} parent=1 // pred_region
      %88 = vst [vmem:[#allocation2] sm:$0xff] 0.0
      %89 = vst [vmem:[#allocation2 + $0x8] sm:$0xff] 0.0
    $region41: #{tpu_custom_call.1} parent=1 // pred_fallthru
      _
    %v90 = vld [vmem:[#allocation2] sm:$0xff]
    %v91 = vld [vmem:[#allocation2 + $0x8] sm:$0xff]
    %v92 = vld [vmem:[#allocation3] sm:$0x1]
    %v93 = vld [vmem:[#allocation6] sm:$0xff]
    %v94 = vld [vmem:[#allocation6 + $0x8] sm:$0xff]
    %v95 = vld [vmem:[#allocation6 + $0x10] sm:$0xff]
    %v96 = vld [vmem:[#allocation6 + $0x18] sm:$0xff]
    %v97 = vld [vmem:[#allocation6 + $0x20] sm:$0xff]
    %v98 = vld [vmem:[#allocation6 + $0x28] sm:$0xff]
    %v99 = vld [vmem:[#allocation6 + $0x30] sm:$0xff]
    %v100 = vld [vmem:[#allocation6 + $0x38] sm:$0xff]
    %v101 = vld [vmem:[#allocation6 + $0x40] sm:$0xff]
    %v102 = vld [vmem:[#allocation6 + $0x48] sm:$0xff]
    %v103 = vld [vmem:[#allocation6 + $0x50] sm:$0xff]
    %v104 = vld [vmem:[#allocation6 + $0x58] sm:$0xff]
    %v105 = vld [vmem:[#allocation6 + $0x60] sm:$0xff]
    %v106 = vld [vmem:[#allocation6 + $0x68] sm:$0xff]
    %v107 = vld [vmem:[#allocation6 + $0x70] sm:$0xff]
    %v108 = vld [vmem:[#allocation6 + $0x78] sm:$0xff]
    %v109 = vld [vmem:[#allocation6 + $0x80] sm:$0xff]
    %v110 = vld [vmem:[#allocation6 + $0x88] sm:$0xff]
    %v111 = vld [vmem:[#allocation6 + $0x90] sm:$0xff]
    %v112 = vld [vmem:[#allocation6 + $0x98] sm:$0xff]
    %v113 = vld [vmem:[#allocation6 + $0xa0] sm:$0xff]
    %v114 = vld [vmem:[#allocation6 + $0xa8] sm:$0xff]
    %v115 = vld [vmem:[#allocation6 + $0xb0] sm:$0xff]
    %v116 = vld [vmem:[#allocation6 + $0xb8] sm:$0xff]
    %v117 = vld [vmem:[#allocation6 + $0xc0] sm:$0xff]
    %v118 = vld [vmem:[#allocation6 + $0xc8] sm:$0xff]
    %v119 = vld [vmem:[#allocation6 + $0xd0] sm:$0xff]
    %v120 = vld [vmem:[#allocation6 + $0xd8] sm:$0xff]
    %v121 = vld [vmem:[#allocation6 + $0xe0] sm:$0xff]
    %v122 = vld [vmem:[#allocation6 + $0xe8] sm:$0xff]
    %v123 = vld [vmem:[#allocation6 + $0xf0] sm:$0xff]
    %v124 = vld [vmem:[#allocation6 + $0xf8] sm:$0xff]
    %v125 = vld [vmem:[#allocation6 + $0x100] sm:$0xff]
    %v126 = vld [vmem:[#allocation6 + $0x108] sm:$0xff]
    %v127 = vld [vmem:[#allocation6 + $0x110] sm:$0xff]
    %v128 = vld [vmem:[#allocation6 + $0x118] sm:$0xff]
    %v129 = vld [vmem:[#allocation6 + $0x120] sm:$0xff]
    %v130 = vld [vmem:[#allocation6 + $0x128] sm:$0xff]
    %v131 = vld [vmem:[#allocation6 + $0x130] sm:$0xff]
    %v132 = vld [vmem:[#allocation6 + $0x138] sm:$0xff]
    %v133 = vld [vmem:[#allocation6 + $0x140] sm:$0xff]
    %v134 = vld [vmem:[#allocation6 + $0x148] sm:$0xff]
    %v135 = vld [vmem:[#allocation6 + $0x150] sm:$0xff]
    %v136 = vld [vmem:[#allocation6 + $0x158] sm:$0xff]
    %v137 = vld [vmem:[#allocation6 + $0x160] sm:$0xff]
    %v138 = vld [vmem:[#allocation6 + $0x168] sm:$0xff]
    %v139 = vld [vmem:[#allocation6 + $0x170] sm:$0xff]
    %v140 = vld [vmem:[#allocation6 + $0x178] sm:$0xff]
    %v141 = vld [vmem:[#allocation6 + $0x180] sm:$0xff]
    %v142 = vld [vmem:[#allocation6 + $0x188] sm:$0xff]
    %v143 = vld [vmem:[#allocation6 + $0x190] sm:$0xff]
    %v144 = vld [vmem:[#allocation6 + $0x198] sm:$0xff]
    %v145 = vld [vmem:[#allocation6 + $0x1a0] sm:$0xff]
    %v146 = vld [vmem:[#allocation6 + $0x1a8] sm:$0xff]
    %v147 = vld [vmem:[#allocation6 + $0x1b0] sm:$0xff]
    %v148 = vld [vmem:[#allocation6 + $0x1b8] sm:$0xff]
    %v149 = vld [vmem:[#allocation6 + $0x1c0] sm:$0xff]
    %v150 = vld [vmem:[#allocation6 + $0x1c8] sm:$0xff]
    %v151 = vld [vmem:[#allocation6 + $0x1d0] sm:$0xff]
    %v152 = vld [vmem:[#allocation6 + $0x1d8] sm:$0xff]
    %v153 = vld [vmem:[#allocation6 + $0x1e0] sm:$0xff]
    %v154 = vld [vmem:[#allocation6 + $0x1e8] sm:$0xff]
    %v155 = vld [vmem:[#allocation6 + $0x1f0] sm:$0xff]
    %v156 = vld [vmem:[#allocation6 + $0x1f8] sm:$0xff]
    %v221 = vunpack.c.l.b16 %v93
    %v222 = vunpack.c.h.b16 %v93
    %v223 = vunpack.c.l.b16 %v94
    %v224 = vunpack.c.h.b16 %v94
    %v225 = vunpack.c.l.b16 %v95
    %v226 = vunpack.c.h.b16 %v95
    %v227 = vunpack.c.l.b16 %v96
    %v228 = vunpack.c.h.b16 %v96
    %v229 = vunpack.c.l.b16 %v97
    %v230 = vunpack.c.h.b16 %v97
    %v231 = vunpack.c.l.b16 %v98
    %v232 = vunpack.c.h.b16 %v98
    %v233 = vunpack.c.l.b16 %v99
    %v234 = vunpack.c.h.b16 %v99
    %v235 = vunpack.c.l.b16 %v100
    %v236 = vunpack.c.h.b16 %v100
    %v237 = vunpack.c.l.b16 %v101
    %v238 = vunpack.c.h.b16 %v101
    %v239 = vunpack.c.l.b16 %v102
    %v240 = vunpack.c.h.b16 %v102
    %v241 = vunpack.c.l.b16 %v103
    %v242 = vunpack.c.h.b16 %v103
    %v243 = vunpack.c.l.b16 %v104
    %v244 = vunpack.c.h.b16 %v104
    %v245 = vunpack.c.l.b16 %v105
    %v246 = vunpack.c.h.b16 %v105
    %v247 = vunpack.c.l.b16 %v106
    %v248 = vunpack.c.h.b16 %v106
    %v249 = vunpack.c.l.b16 %v107
    %v250 = vunpack.c.h.b16 %v107
    %v251 = vunpack.c.l.b16 %v108
    %v252 = vunpack.c.h.b16 %v108
    %v253 = vunpack.c.l.b16 %v109
    %v254 = vunpack.c.h.b16 %v109
    %v255 = vunpack.c.l.b16 %v110
    %v256 = vunpack.c.h.b16 %v110
    %v257 = vunpack.c.l.b16 %v111
    %v258 = vunpack.c.h.b16 %v111
    %v259 = vunpack.c.l.b16 %v112
    %v260 = vunpack.c.h.b16 %v112
    %v261 = vunpack.c.l.b16 %v113
    %v262 = vunpack.c.h.b16 %v113
    %v263 = vunpack.c.l.b16 %v114
    %v264 = vunpack.c.h.b16 %v114
    %v265 = vunpack.c.l.b16 %v115
    %v266 = vunpack.c.h.b16 %v115
    %v267 = vunpack.c.l.b16 %v116
    %v268 = vunpack.c.h.b16 %v116
    %v269 = vunpack.c.l.b16 %v117
    %v270 = vunpack.c.h.b16 %v117
    %v271 = vunpack.c.l.b16 %v118
    %v272 = vunpack.c.h.b16 %v118
    %v273 = vunpack.c.l.b16 %v119
    %v274 = vunpack.c.h.b16 %v119
    %v275 = vunpack.c.l.b16 %v120
    %v276 = vunpack.c.h.b16 %v120
    %v277 = vunpack.c.l.b16 %v121
    %v278 = vunpack.c.h.b16 %v121
    %v279 = vunpack.c.l.b16 %v122
    %v280 = vunpack.c.h.b16 %v122
    %v281 = vunpack.c.l.b16 %v123
    %v282 = vunpack.c.h.b16 %v123
    %v283 = vunpack.c.l.b16 %v124
    %v284 = vunpack.c.h.b16 %v124
    %v285 = vunpack.c.l.b16 %v125
    %v286 = vunpack.c.h.b16 %v125
    %v287 = vunpack.c.l.b16 %v126
    %v288 = vunpack.c.h.b16 %v126
    %v289 = vunpack.c.l.b16 %v127
    %v290 = vunpack.c.h.b16 %v127
    %v291 = vunpack.c.l.b16 %v128
    %v292 = vunpack.c.h.b16 %v128
    %v293 = vunpack.c.l.b16 %v129
    %v294 = vunpack.c.h.b16 %v129
    %v295 = vunpack.c.l.b16 %v130
    %v296 = vunpack.c.h.b16 %v130
    %v297 = vunpack.c.l.b16 %v131
    %v298 = vunpack.c.h.b16 %v131
    %v299 = vunpack.c.l.b16 %v132
    %v300 = vunpack.c.h.b16 %v132
    %v301 = vunpack.c.l.b16 %v133
    %v302 = vunpack.c.h.b16 %v133
    %v303 = vunpack.c.l.b16 %v134
    %v304 = vunpack.c.h.b16 %v134
    %v305 = vunpack.c.l.b16 %v135
    %v306 = vunpack.c.h.b16 %v135
    %v307 = vunpack.c.l.b16 %v136
    %v308 = vunpack.c.h.b16 %v136
    %v309 = vunpack.c.l.b16 %v137
    %v310 = vunpack.c.h.b16 %v137
    %v311 = vunpack.c.l.b16 %v138
    %v312 = vunpack.c.h.b16 %v138
    %v313 = vunpack.c.l.b16 %v139
    %v314 = vunpack.c.h.b16 %v139
    %v315 = vunpack.c.l.b16 %v140
    %v316 = vunpack.c.h.b16 %v140
    %v317 = vunpack.c.l.b16 %v141
    %v318 = vunpack.c.h.b16 %v141
    %v319 = vunpack.c.l.b16 %v142
    %v320 = vunpack.c.h.b16 %v142
    %v321 = vunpack.c.l.b16 %v143
    %v322 = vunpack.c.h.b16 %v143
    %v323 = vunpack.c.l.b16 %v144
    %v324 = vunpack.c.h.b16 %v144
    %v325 = vunpack.c.l.b16 %v145
    %v326 = vunpack.c.h.b16 %v145
    %v327 = vunpack.c.l.b16 %v146
    %v328 = vunpack.c.h.b16 %v146
    %v329 = vunpack.c.l.b16 %v147
    %v330 = vunpack.c.h.b16 %v147
    %v331 = vunpack.c.l.b16 %v148
    %v332 = vunpack.c.h.b16 %v148
    %v333 = vunpack.c.l.b16 %v149
    %v334 = vunpack.c.h.b16 %v149
    %v335 = vunpack.c.l.b16 %v150
    %v336 = vunpack.c.h.b16 %v150
    %v337 = vunpack.c.l.b16 %v151
    %v338 = vunpack.c.h.b16 %v151
    %v339 = vunpack.c.l.b16 %v152
    %v340 = vunpack.c.h.b16 %v152
    %v341 = vunpack.c.l.b16 %v153
    %v342 = vunpack.c.h.b16 %v153
    %v343 = vunpack.c.l.b16 %v154
    %v344 = vunpack.c.h.b16 %v154
    %v345 = vunpack.c.l.b16 %v155
    %v346 = vunpack.c.h.b16 %v155
    %v347 = vunpack.c.l.b16 %v156
    %v348 = vunpack.c.h.b16 %v156
    %v349 = vpack.c.b16 %v229, %v221
    %v350 = vpack.c.b16 %v230, %v222
    %v351 = vpack.c.b16 %v231, %v223
    %v352 = vpack.c.b16 %v232, %v224
    %v353 = vpack.c.b16 %v233, %v225
    %v354 = vpack.c.b16 %v234, %v226
    %v355 = vpack.c.b16 %v235, %v227
    %v356 = vpack.c.b16 %v236, %v228
    %v357 = vpack.c.b16 %v245, %v237
    %v358 = vpack.c.b16 %v246, %v238
    %v359 = vpack.c.b16 %v247, %v239
    %v360 = vpack.c.b16 %v248, %v240
    %v361 = vpack.c.b16 %v249, %v241
    %v362 = vpack.c.b16 %v250, %v242
    %v363 = vpack.c.b16 %v251, %v243
    %v364 = vpack.c.b16 %v252, %v244
    %v365 = vpack.c.b16 %v261, %v253
    %v366 = vpack.c.b16 %v262, %v254
    %v367 = vpack.c.b16 %v263, %v255
    %v368 = vpack.c.b16 %v264, %v256
    %v369 = vpack.c.b16 %v265, %v257
    %v370 = vpack.c.b16 %v266, %v258
    %v371 = vpack.c.b16 %v267, %v259
    %v372 = vpack.c.b16 %v268, %v260
    %v373 = vpack.c.b16 %v277, %v269
    %v374 = vpack.c.b16 %v278, %v270
    %v375 = vpack.c.b16 %v279, %v271
    %v376 = vpack.c.b16 %v280, %v272
    %v377 = vpack.c.b16 %v281, %v273
    %v378 = vpack.c.b16 %v282, %v274
    %v379 = vpack.c.b16 %v283, %v275
    %v380 = vpack.c.b16 %v284, %v276
    %v381 = vpack.c.b16 %v293, %v285
    %v382 = vpack.c.b16 %v294, %v286
    %v383 = vpack.c.b16 %v295, %v287
    %v384 = vpack.c.b16 %v296, %v288
    %v385 = vpack.c.b16 %v297, %v289
    %v386 = vpack.c.b16 %v298, %v290
    %v387 = vpack.c.b16 %v299, %v291
    %v388 = vpack.c.b16 %v300, %v292
    %v389 = vpack.c.b16 %v309, %v301
    %v390 = vpack.c.b16 %v310, %v302
    %v391 = vpack.c.b16 %v311, %v303
    %v392 = vpack.c.b16 %v312, %v304
    %v393 = vpack.c.b16 %v313, %v305
    %v394 = vpack.c.b16 %v314, %v306
    %v395 = vpack.c.b16 %v315, %v307
    %v396 = vpack.c.b16 %v316, %v308
    %v397 = vpack.c.b16 %v325, %v317
    %v398 = vpack.c.b16 %v326, %v318
    %v399 = vpack.c.b16 %v327, %v319
    %v400 = vpack.c.b16 %v328, %v320
    %v401 = vpack.c.b16 %v329, %v321
    %v402 = vpack.c.b16 %v330, %v322
    %v403 = vpack.c.b16 %v331, %v323
    %v404 = vpack.c.b16 %v332, %v324
    %v405 = vpack.c.b16 %v341, %v333
    %v406 = vpack.c.b16 %v342, %v334
    %v407 = vpack.c.b16 %v343, %v335
    %v408 = vpack.c.b16 %v344, %v336
    %v409 = vpack.c.b16 %v345, %v337
    %v410 = vpack.c.b16 %v346, %v338
    %v411 = vpack.c.b16 %v347, %v339
    %v412 = vpack.c.b16 %v348, %v340
    %477 = vmatpush.bf16.msra.mxu0 %v405
    %478 = vmatpush.bf16.msra.mxu0 %v397
    %479 = vmatpush.bf16.msra.mxu0 %v389
    %480 = vmatpush.bf16.msra.mxu0 %v381
    %481 = vmatpush.bf16.msra.mxu0 %v373
    %482 = vmatpush.bf16.msra.mxu0 %v365
    %483 = vmatpush.bf16.msra.mxu0 %v357
    %484 = vmatpush.bf16.msra.mxu0 %v349
    %485 = vmatmul.bf16.gmra.mxu0 %v92
    %v486 = vpop.f32.mrf.mxu0
    %v487 = vadd.f32 0.0, %v486
    %v488 = vpop.f32.mrf.mxu0
    %489 = vdwg.mxu0
    %490 = vmatpush.bf16.msra.mxu0 %v406
    %491 = vmatpush.bf16.msra.mxu0 %v398
    %492 = vmatpush.bf16.msra.mxu0 %v390
    %493 = vmatpush.bf16.msra.mxu0 %v382
    %494 = vmatpush.bf16.msra.mxu0 %v374
    %495 = vmatpush.bf16.msra.mxu0 %v366
    %496 = vmatpush.bf16.msra.mxu0 %v358
    %497 = vmatpush.bf16.msra.mxu0 %v350
    %498 = vmatmul.bf16.gmra.mxu0 %v92
    %v499 = vpop.f32.mrf.mxu0
    %v500 = vadd.f32 0.0, %v499
    %v501 = vpop.f32.mrf.mxu0
    %502 = vdwg.mxu0
    %503 = vmatpush.bf16.msra.mxu0 %v407
    %504 = vmatpush.bf16.msra.mxu0 %v399
    %505 = vmatpush.bf16.msra.mxu0 %v391
    %506 = vmatpush.bf16.msra.mxu0 %v383
    %507 = vmatpush.bf16.msra.mxu0 %v375
    %508 = vmatpush.bf16.msra.mxu0 %v367
    %509 = vmatpush.bf16.msra.mxu0 %v359
    %510 = vmatpush.bf16.msra.mxu0 %v351
    %511 = vmatmul.bf16.gmra.mxu0 %v92
    %v512 = vpop.f32.mrf.mxu0
    %v513 = vadd.f32 0.0, %v512
    %v514 = vpop.f32.mrf.mxu0
    %515 = vdwg.mxu0
    %516 = vmatpush.bf16.msra.mxu0 %v408
    %517 = vmatpush.bf16.msra.mxu0 %v400
    %518 = vmatpush.bf16.msra.mxu0 %v392
    %519 = vmatpush.bf16.msra.mxu0 %v384
    %520 = vmatpush.bf16.msra.mxu0 %v376
    %521 = vmatpush.bf16.msra.mxu0 %v368
    %522 = vmatpush.bf16.msra.mxu0 %v360
    %523 = vmatpush.bf16.msra.mxu0 %v352
    %524 = vmatmul.bf16.gmra.mxu0 %v92
    %v525 = vpop.f32.mrf.mxu0
    %v526 = vadd.f32 0.0, %v525
    %v527 = vpop.f32.mrf.mxu0
    %528 = vdwg.mxu0
    %529 = vmatpush.bf16.msra.mxu0 %v409
    %530 = vmatpush.bf16.msra.mxu0 %v401
    %531 = vmatpush.bf16.msra.mxu0 %v393
    %532 = vmatpush.bf16.msra.mxu0 %v385
    %533 = vmatpush.bf16.msra.mxu0 %v377
    %534 = vmatpush.bf16.msra.mxu0 %v369
    %535 = vmatpush.bf16.msra.mxu0 %v361
    %536 = vmatpush.bf16.msra.mxu0 %v353
    %537 = vmatmul.bf16.gmra.mxu0 %v92
    %v538 = vpop.f32.mrf.mxu0
    %v539 = vadd.f32 0.0, %v538
    %v540 = vpop.f32.mrf.mxu0
    %541 = vdwg.mxu0
    %542 = vmatpush.bf16.msra.mxu0 %v410
    %543 = vmatpush.bf16.msra.mxu0 %v402
    %544 = vmatpush.bf16.msra.mxu0 %v394
    %545 = vmatpush.bf16.msra.mxu0 %v386
    %546 = vmatpush.bf16.msra.mxu0 %v378
    %547 = vmatpush.bf16.msra.mxu0 %v370
    %548 = vmatpush.bf16.msra.mxu0 %v362
    %549 = vmatpush.bf16.msra.mxu0 %v354
    %550 = vmatmul.bf16.gmra.mxu0 %v92
    %v551 = vpop.f32.mrf.mxu0
    %v552 = vadd.f32 0.0, %v551
    %v553 = vpop.f32.mrf.mxu0
    %554 = vdwg.mxu0
    %555 = vmatpush.bf16.msra.mxu0 %v411
    %556 = vmatpush.bf16.msra.mxu0 %v403
    %557 = vmatpush.bf16.msra.mxu0 %v395
    %558 = vmatpush.bf16.msra.mxu0 %v387
    %559 = vmatpush.bf16.msra.mxu0 %v379
    %560 = vmatpush.bf16.msra.mxu0 %v371
    %561 = vmatpush.bf16.msra.mxu0 %v363
    %562 = vmatpush.bf16.msra.mxu0 %v355
    %563 = vmatmul.bf16.gmra.mxu0 %v92
    %v564 = vpop.f32.mrf.mxu0
    %v565 = vadd.f32 0.0, %v564
    %v566 = vpop.f32.mrf.mxu0
    %567 = vdwg.mxu0
    %568 = vmatpush.bf16.msra.mxu0 %v412
    %569 = vmatpush.bf16.msra.mxu0 %v404
    %570 = vmatpush.bf16.msra.mxu0 %v396
    %571 = vmatpush.bf16.msra.mxu0 %v388
    %572 = vmatpush.bf16.msra.mxu0 %v380
    %573 = vmatpush.bf16.msra.mxu0 %v372
    %574 = vmatpush.bf16.msra.mxu0 %v364
    %575 = vmatpush.bf16.msra.mxu0 %v356
    %576 = vmatmul.bf16.gmra.mxu0 %v92
    %v577 = vpop.f32.mrf.mxu0
    %v578 = vadd.f32 0.0, %v577
    %v579 = vpop.f32.mrf.mxu0
    %580 = vdwg.mxu0
    %v589 = vrot.slane %v500, 6
    %v590 = vrot.slane %v513, 4
    %v591 = vrot.slane %v526, 2
    %v592 = vrot.slane %v552, 6
    %v593 = vrot.slane %v565, 4
    %v594 = vrot.slane %v578, 2
    %vm595 = vcmask 1041408
    %v596 = vsel %vm595, %v487, %v589
    %vm597 = vcmask 1045508
    %v598 = vsel %vm597, %v590, %v591
    %vm599 = vcmask 1043456
    %v600 = vsel %vm599, %v596, %v598
    %v601 = vsel %vm595, %v539, %v592
    %v602 = vsel %vm597, %v593, %v594
    %v603 = vsel %vm599, %v601, %v602
    %v606 = vadd.f32 %v90, %v600
    %v607 = vadd.f32 %v91, %v603
    %608 = vst [vmem:[#allocation2] sm:$0xff] %v606
    %609 = vst [vmem:[#allocation2 + $0x8] sm:$0xff] %v607
    // Predicated region
    $region42: #{tpu_custom_call.1} parent=1 // pred_check
      %p610 = pneg %p84
    $region43: #{tpu_custom_call.1} parent=1 // pred_check_branch
      %612 = sbr.rel (%p610) target = $region45
    $region44: #{tpu_custom_call.1} parent=1 // pred_region
      %v613 = vld [vmem:[#allocation2] sm:$0xff]
      %v614 = vld [vmem:[#allocation2 + $0x8] sm:$0xff]
      %v615 = vld [vmem:[#allocation8] sm:$0xff]
      %v617 = vperm.slane %v615, 0
      %v618 = vperm.slane %v615, 1
      %v619 = vperm.slane %v615, 2
      %v620 = vperm.slane %v615, 3
      %v621 = vperm.slane %v615, 4
      %v622 = vperm.slane %v615, 5
      %v623 = vperm.slane %v615, 6
      %v624 = vperm.slane %v615, 7
      %v625 = vrot.slane %v618, 6
      %v626 = vrot.slane %v619, 4
      %v627 = vrot.slane %v620, 2
      %v628 = vrot.slane %v622, 6
      %v629 = vrot.slane %v623, 4
      %v630 = vrot.slane %v624, 2
      %v631 = vsel %vm595, %v617, %v625
      %v632 = vsel %vm597, %v626, %v627
      %v633 = vsel %vm599, %v631, %v632
      %v634 = vsel %vm595, %v621, %v628
      %v635 = vsel %vm597, %v629, %v630
      %v636 = vsel %vm599, %v634, %v635
      %v639 = vadd.f32 %v613, %v633
      %v640 = vadd.f32 %v614, %v636
      %v643 = vrot.slane %v639, 1
      %v644 = vrot.slane %v639, 2
      %v645 = vrot.slane %v639, 3
      %v646 = vrot.slane %v640, 4
      %v647 = vrot.slane %v640, 5
      %v648 = vrot.slane %v640, 6
      %v649 = vrot.slane %v640, 7
      %vm650 = vcmask 1040384
      %v651 = vsel %vm650, %v639, %v643
      %vm652 = vcmask 1042434
      %v653 = vsel %vm652, %v644, %v645
      %v654 = vsel %vm595, %v651, %v653
      %vm655 = vcmask 1044484
      %v656 = vsel %vm655, %v646, %v647
      %vm657 = vcmask 1046534
      %v658 = vsel %vm657, %v648, %v649
      %v659 = vsel %vm597, %v656, %v658
      %v660 = vsel %vm599, %v654, %v659
      %vm661 = vcmask 1041409
      %v662 = vsel %vm661, %v639, %v643
      %vm663 = vcmask 1043459
      %v664 = vsel %vm663, %v644, %v645
      %vm665 = vcmask 1042433
      %v666 = vsel %vm665, %v662, %v664
      %vm667 = vcmask 1045509
      %v668 = vsel %vm667, %v646, %v647
      %vm669 = vcmask 1046528
      %v670 = vsel %vm669, %v649, %v648
      %vm671 = vcmask 1046533
      %v672 = vsel %vm671, %v668, %v670
      %vm673 = vcmask 1044481
      %v674 = vsel %vm673, %v666, %v672
      %v675 = vrot.slane %v674, 1
      %v678 = vpack.c.bf16 %v675, %v660
      %v679 = vld [vmem:[#allocation9] sm:$0xf]
      %v680 = vld [vmem:[#allocation9 + $0x4] sm:$0xf]
      %v681 = vld [vmem:[#allocation9 + $0x8] sm:$0xf]
      %v682 = vld [vmem:[#allocation9 + $0xc] sm:$0xf]
      %v683 = vld [vmem:[#allocation9 + $0x10] sm:$0xf]
      %v684 = vld [vmem:[#allocation9 + $0x14] sm:$0xf]
      %v685 = vld [vmem:[#allocation9 + $0x18] sm:$0xf]
      %v686 = vld [vmem:[#allocation9 + $0x1c] sm:$0xf]
      %v687 = vld [vmem:[#allocation9 + $0x20] sm:$0xf]
      %v688 = vld [vmem:[#allocation9 + $0x24] sm:$0xf]
      %v689 = vld [vmem:[#allocation9 + $0x28] sm:$0xf]
      %v690 = vld [vmem:[#allocation9 + $0x2c] sm:$0xf]
      %v691 = vld [vmem:[#allocation9 + $0x30] sm:$0xf]
      %v692 = vld [vmem:[#allocation9 + $0x34] sm:$0xf]
      %v693 = vld [vmem:[#allocation9 + $0x38] sm:$0xf]
      %v694 = vld [vmem:[#allocation9 + $0x3c] sm:$0xf]
      %v711 = vunpack.c.l.b16 %v679
      %v712 = vunpack.c.l.b16 %v680
      %v713 = vunpack.c.l.b16 %v681
      %v714 = vunpack.c.l.b16 %v682
      %v715 = vunpack.c.l.b16 %v683
      %v716 = vunpack.c.l.b16 %v684
      %v717 = vunpack.c.l.b16 %v685
      %v718 = vunpack.c.l.b16 %v686
      %v719 = vunpack.c.l.b16 %v687
      %v720 = vunpack.c.l.b16 %v688
      %v721 = vunpack.c.l.b16 %v689
      %v722 = vunpack.c.l.b16 %v690
      %v723 = vunpack.c.l.b16 %v691
      %v724 = vunpack.c.l.b16 %v692
      %v725 = vunpack.c.l.b16 %v693
      %v726 = vunpack.c.l.b16 %v694
      %v727 = vpack.c.b16 %v712, %v711
      %v728 = vpack.c.b16 %v714, %v713
      %v729 = vpack.c.b16 %v716, %v715
      %v730 = vpack.c.b16 %v718, %v717
      %v731 = vpack.c.b16 %v720, %v719
      %v732 = vpack.c.b16 %v722, %v721
      %v733 = vpack.c.b16 %v724, %v723
      %v734 = vpack.c.b16 %v726, %v725
      %743 = vmatpush.bf16.msra.mxu0 %v734
      %744 = vmatpush.bf16.msra.mxu0 %v733
      %745 = vmatpush.bf16.msra.mxu0 %v732
      %746 = vmatpush.bf16.msra.mxu0 %v731
      %747 = vmatpush.bf16.msra.mxu0 %v730
      %748 = vmatpush.bf16.msra.mxu0 %v729
      %749 = vmatpush.bf16.msra.mxu0 %v728
      %750 = vmatpush.bf16.msra.mxu0 %v727
      %751 = vmatmul.bf16.gmra.mxu0 %v678
      %v752 = vpop.f32.mrf.mxu0
      %v753 = vadd.f32 0.0, %v752
      %v754 = vpop.f32.mrf.mxu0
      %v755 = vadd.f32 0.0, %v754
      %756 = vdwg.mxu0
      %v757 = vmul.f32 %v753, %v753
      %v758 = vmul.f32 %v755, %v755
      %v759 = vld [vmem:[%s4] sm:$0x1]
      %v761 = vperm.slane %v759, 0
      %v763 = vmul.f32 %v757, %v761
      %v764 = vmul.f32 %v758, %v761
      %v765 = vlaneseq
      %v766 = vand.u32 %v765, 127
      %vm767 = vcmp.lt.s32.totalorder %v766, 4
      %v768 = vsel %vm767, 1, 0
      %vm769 = vcmp.eq.s32.totalorder %v768, 1
      %v770 = vsel %vm769, %v763, -inf
      %v771 = vsel %vm769, %v764, -inf
      %772 = vmax.xlane.f32.xlu0 %v770
      %v773 = vpop.xlane.xlu0 %772
      %774 = vmax.xlane.f32.xlu0 %v771
      %v775 = vpop.xlane.xlu0 %774
      %v776 = vsub.f32 %v770, %v773
      %v777 = vsub.f32 %v771, %v775
      %v778 = vmul.f32 %v776, 1.442695
      %v779 = vpow.pop %v778
      %v780 = vmul.f32 %v777, 1.442695
      %v781 = vpow.pop %v780
      %782 = vadd.xlane.f32.xlu0 %v779
      %v783 = vpop.xlane.xlu0 %782
      %784 = vadd.xlane.f32.xlu0 %v781
      %v785 = vpop.xlane.xlu0 %784
      %v786 = vrcp.pop %v783
      %v787 = vmul.f32 %v783, %v786
      %v788 = vsub.f32 1.0, %v787
      %v789 = vmul.f32 %v786, %v788
      %v790 = vadd.f32 %v786, %v789
      %vm791 = vweird.f32 %v783
      %vm792 = vweird.f32 %v786
      %vm793 = vmor %vm791, %vm792
      %v794 = vsel %vm793, %v786, %v790
      %v795 = vand.u32 2147483647, %v783
      %vm796 = vcmp.eq.f32.partialorder %v795, 8.507059e+37
      %v797 = vand.u32 %v783, 2147483648
      %v798 = vor.u32 1.1754944e-38, %v797
      %v799 = vsel %vm796, %v798, %v794
      %v800 = vmul.f32 %v779, %v799
      %v801 = vrcp.pop %v785
      %v802 = vmul.f32 %v785, %v801
      %v803 = vsub.f32 1.0, %v802
      %v804 = vmul.f32 %v801, %v803
      %v805 = vadd.f32 %v801, %v804
      %vm806 = vweird.f32 %v785
      %vm807 = vweird.f32 %v801
      %vm808 = vmor %vm806, %vm807
      %v809 = vsel %vm808, %v801, %v805
      %v810 = vand.u32 2147483647, %v785
      %vm811 = vcmp.eq.f32.partialorder %v810, 8.507059e+37
      %v812 = vand.u32 %v785, 2147483648
      %v813 = vor.u32 1.1754944e-38, %v812
      %v814 = vsel %vm811, %v813, %v809
      %v815 = vmul.f32 %v781, %v814
      %v817 = vrot.slane %v639, 4
      %v819 = vrot.slane %v639, 6
      %v821 = vrot.slane %v640, 2
      %v825 = vrot.slane %v644, 4
      %vm826 = vcmask 1047556
      %v827 = vsel %vm826, %v825, %v639
      %v829 = vunpack.c.l.s4 1934713408
      %v830 = vunpack.c.0.s8 %v829
      %v831 = vperm.slane %v827, %v830
      %v832 = vrot.slane %v831, 4
      %v833 = vsel %vm826, 0.0, %v832
      %v834 = vrot.slane %v819, 4
      %v835 = vsel %vm826, %v834, %v817
      %v837 = vunpack.c.l.s4 1934713408
      %v838 = vunpack.c.0.s8 %v837
      %v839 = vperm.slane %v835, %v838
      %v840 = vrot.slane %v839, 4
      %v841 = vsel %vm826, 0.0, %v840
      %v842 = vrot.slane %v821, 4
      %v843 = vsel %vm826, %v842, %v640
      %v845 = vunpack.c.l.s4 1934713408
      %v846 = vunpack.c.0.s8 %v845
      %v847 = vperm.slane %v843, %v846
      %v848 = vrot.slane %v847, 4
      %v849 = vsel %vm826, 0.0, %v848
      %v850 = vrot.slane %v648, 4
      %v851 = vsel %vm826, %v850, %v646
      %v853 = vunpack.c.l.s4 1934713408
      %v854 = vunpack.c.0.s8 %v853
      %v855 = vperm.slane %v851, %v854
      %v856 = vrot.slane %v855, 4
      %v857 = vsel %vm826, 0.0, %v856
      %858 = vst [vmem:[#allocation11] sm:$0xff] %v800
      %859 = vst [vmem:[#allocation11 + $0x8] sm:$0xff] %v815
      %v860 = vpack.c.bf16 %v800, %v800
      %v861 = vpack.c.bf16 %v815, %v815
      %870 = vst [vmem:[#allocation1] ss:$4 sm:$0xff] %v831
      %s871 = scalar_lea.vmem [#allocation1], 1
      %872 = vst [vmem:[%s871] ss:$4 sm:$0xff] %v839
      %s873 = scalar_lea.vmem [#allocation1], 2
      %874 = vst [vmem:[%s873] ss:$4 sm:$0xff] %v847
      %s875 = scalar_lea.vmem [#allocation1], 3
      %876 = vst [vmem:[%s875] ss:$4 sm:$0xff] %v855
      %v877 = vld.sshfl [vmem:[#allocation1] sm:$0xff pattern:$0x73625140]
      %s878 = scalar_lea.vmem [#allocation1], 32
      %879 = vst [vmem:[%s878] ss:$4 sm:$0xff] %v833
      %s880 = scalar_lea.vmem [#allocation1], 33
      %881 = vst [vmem:[%s880] ss:$4 sm:$0xff] %v841
      %s882 = scalar_lea.vmem [#allocation1], 34
      %883 = vst [vmem:[%s882] ss:$4 sm:$0xff] %v849
      %s884 = scalar_lea.vmem [#allocation1], 35
      %885 = vst [vmem:[%s884] ss:$4 sm:$0xff] %v857
      %v886 = vld.sshfl [vmem:[#allocation1 + $0x20] sm:$0xff pattern:$0x73625140]
      %v889 = vpack.c.bf16 %v877, %v877
      %v890 = vpack.c.bf16 %v886, %v886
      %891 = vxpose.xlu0.c.b16.start [1/8] %v860, 128
      %892 = vxpose.xlu0.c.b16.cont [2/8] 0, 128
      %893 = vxpose.xlu0.c.b16.cont [3/8] 0, 128
      %894 = vxpose.xlu0.c.b16.cont [4/8] 0, 128
      %895 = vxpose.xlu0.c.b16.cont [5/8] 0, 128
      %896 = vxpose.xlu0.c.b16.cont [6/8] 0, 128
      %897 = vxpose.xlu0.c.b16.cont [7/8] 0, 128
      %898 = vxpose.xlu0.c.b16.end [8/8] 0, 128
      %v899 = vpop.trf.xlu0
      %v900 = vpop.trf.xlu0
      %v901 = vpop.trf.xlu0
      %v902 = vpop.trf.xlu0
      %v903 = vpop.trf.xlu0
      %v904 = vpop.trf.xlu0
      %v905 = vpop.trf.xlu0
      %v906 = vpop.trf.xlu0
      %vm907 = vcmask 64512
      %v909 = vsel %vm907, %v899, 0
      %v912 = vsel %vm907, %v900, 0
      %v915 = vsel %vm907, %v901, 0
      %v918 = vsel %vm907, %v902, 0
      %v921 = vsel %vm907, %v903, 0
      %v924 = vsel %vm907, %v904, 0
      %v927 = vsel %vm907, %v905, 0
      %v930 = vsel %vm907, %v906, 0
      %v933 = vsel %vm599, %v889, 0
      %935 = vmatpush.bf16.msra.mxu0 0
      %936 = vmatpush.bf16.msra.mxu0 0
      %937 = vmatpush.bf16.msra.mxu0 0
      %938 = vmatpush.bf16.msra.mxu0 0
      %939 = vmatpush.bf16.msra.mxu0 0
      %940 = vmatpush.bf16.msra.mxu0 0
      %941 = vmatpush.bf16.msra.mxu0 0
      %942 = vmatpush.bf16.msra.mxu0 %v933
      %943 = vmatmul.bf16.gmra.mxu0 %v909
      %v944 = vpop.f32.mrf.mxu0
      %v945 = vadd.f32 0.0, %v944
      %v946 = vpop.f32.mrf.mxu0
      %v947 = vadd.f32 0.0, %v946
      %948 = vmatmul.bf16.gmra.mxu0 %v912
      %v949 = vpop.f32.mrf.mxu0
      %v950 = vadd.f32 0.0, %v949
      %v951 = vpop.f32.mrf.mxu0
      %v952 = vadd.f32 0.0, %v951
      %953 = vmatmul.bf16.gmra.mxu0 %v915
      %v954 = vpop.f32.mrf.mxu0
      %v955 = vadd.f32 0.0, %v954
      %v956 = vpop.f32.mrf.mxu0
      %v957 = vadd.f32 0.0, %v956
      %958 = vmatmul.bf16.gmra.mxu0 %v918
      %v959 = vpop.f32.mrf.mxu0
      %v960 = vadd.f32 0.0, %v959
      %v961 = vpop.f32.mrf.mxu0
      %v962 = vadd.f32 0.0, %v961
      %963 = vmatmul.bf16.gmra.mxu0 %v921
      %v964 = vpop.f32.mrf.mxu0
      %v965 = vadd.f32 0.0, %v964
      %v966 = vpop.f32.mrf.mxu0
      %v967 = vadd.f32 0.0, %v966
      %968 = vmatmul.bf16.gmra.mxu0 %v924
      %v969 = vpop.f32.mrf.mxu0
      %v970 = vadd.f32 0.0, %v969
      %v971 = vpop.f32.mrf.mxu0
      %v972 = vadd.f32 0.0, %v971
      %973 = vmatmul.bf16.gmra.mxu0 %v927
      %v974 = vpop.f32.mrf.mxu0
      %v975 = vadd.f32 0.0, %v974
      %v976 = vpop.f32.mrf.mxu0
      %v977 = vadd.f32 0.0, %v976
      %978 = vmatmul.bf16.gmra.mxu0 %v930
      %v979 = vpop.f32.mrf.mxu0
      %v980 = vadd.f32 0.0, %v979
      %v981 = vpop.f32.mrf.mxu0
      %v982 = vadd.f32 0.0, %v981
      %983 = vdwg.mxu0
      %984 = vxpose.xlu0.c.b16.start [1/8] %v861, 128
      %985 = vxpose.xlu0.c.b16.cont [2/8] 0, 128
      %986 = vxpose.xlu0.c.b16.cont [3/8] 0, 128
      %987 = vxpose.xlu0.c.b16.cont [4/8] 0, 128
      %988 = vxpose.xlu0.c.b16.cont [5/8] 0, 128
      %989 = vxpose.xlu0.c.b16.cont [6/8] 0, 128
      %990 = vxpose.xlu0.c.b16.cont [7/8] 0, 128
      %991 = vxpose.xlu0.c.b16.end [8/8] 0, 128
      %v992 = vpop.trf.xlu0
      %v993 = vpop.trf.xlu0
      %v994 = vpop.trf.xlu0
      %v995 = vpop.trf.xlu0
      %v996 = vpop.trf.xlu0
      %v997 = vpop.trf.xlu0
      %v998 = vpop.trf.xlu0
      %v999 = vpop.trf.xlu0
      %v1001 = vsel %vm907, %v992, 0
      %v1004 = vsel %vm907, %v993, 0
      %v1007 = vsel %vm907, %v994, 0
      %v1010 = vsel %vm907, %v995, 0
      %v1013 = vsel %vm907, %v996, 0
      %v1016 = vsel %vm907, %v997, 0
      %v1019 = vsel %vm907, %v998, 0
      %v1022 = vsel %vm907, %v999, 0
      %v1025 = vsel %vm599, %v890, 0
      %1027 = vmatpush.bf16.msra.mxu0 0
      %1028 = vmatpush.bf16.msra.mxu0 0
      %1029 = vmatpush.bf16.msra.mxu0 0
      %1030 = vmatpush.bf16.msra.mxu0 0
      %1031 = vmatpush.bf16.msra.mxu0 0
      %1032 = vmatpush.bf16.msra.mxu0 0
      %1033 = vmatpush.bf16.msra.mxu0 0
      %1034 = vmatpush.bf16.msra.mxu0 %v1025
      %1035 = vmatmul.bf16.gmra.mxu0 %v1001
      %v1036 = vpop.f32.mrf.mxu0
      %v1037 = vadd.f32 0.0, %v1036
      %v1038 = vpop.f32.mrf.mxu0
      %v1039 = vadd.f32 0.0, %v1038
      %1040 = vmatmul.bf16.gmra.mxu0 %v1004
      %v1041 = vpop.f32.mrf.mxu0
      %v1042 = vadd.f32 0.0, %v1041
      %v1043 = vpop.f32.mrf.mxu0
      %v1044 = vadd.f32 0.0, %v1043
      %1045 = vmatmul.bf16.gmra.mxu0 %v1007
      %v1046 = vpop.f32.mrf.mxu0
      %v1047 = vadd.f32 0.0, %v1046
      %v1048 = vpop.f32.mrf.mxu0
      %v1049 = vadd.f32 0.0, %v1048
      %1050 = vmatmul.bf16.gmra.mxu0 %v1010
      %v1051 = vpop.f32.mrf.mxu0
      %v1052 = vadd.f32 0.0, %v1051
      %v1053 = vpop.f32.mrf.mxu0
      %v1054 = vadd.f32 0.0, %v1053
      %1055 = vmatmul.bf16.gmra.mxu0 %v1013
      %v1056 = vpop.f32.mrf.mxu0
      %v1057 = vadd.f32 0.0, %v1056
      %v1058 = vpop.f32.mrf.mxu0
      %v1059 = vadd.f32 0.0, %v1058
      %1060 = vmatmul.bf16.gmra.mxu0 %v1016
      %v1061 = vpop.f32.mrf.mxu0
      %v1062 = vadd.f32 0.0, %v1061
      %v1063 = vpop.f32.mrf.mxu0
      %v1064 = vadd.f32 0.0, %v1063
      %1065 = vmatmul.bf16.gmra.mxu0 %v1019
      %v1066 = vpop.f32.mrf.mxu0
      %v1067 = vadd.f32 0.0, %v1066
      %v1068 = vpop.f32.mrf.mxu0
      %v1069 = vadd.f32 0.0, %v1068
      %1070 = vmatmul.bf16.gmra.mxu0 %v1022
      %v1071 = vpop.f32.mrf.mxu0
      %v1072 = vadd.f32 0.0, %v1071
      %v1073 = vpop.f32.mrf.mxu0
      %v1074 = vadd.f32 0.0, %v1073
      %1075 = vdwg.mxu0
      %1076 = vst [vmem:[#allocation12] sm:$0xff] %v945
      %1077 = vst [vmem:[#allocation12 + $0x8] sm:$0xff] %v947
      %1078 = vst [vmem:[#allocation12 + $0x10] sm:$0xff] %v950
      %1079 = vst [vmem:[#allocation12 + $0x18] sm:$0xff] %v952
      %1080 = vst [vmem:[#allocation12 + $0x20] sm:$0xff] %v955
      %1081 = vst [vmem:[#allocation12 + $0x28] sm:$0xff] %v957
      %1082 = vst [vmem:[#allocation12 + $0x30] sm:$0xff] %v960
      %1083 = vst [vmem:[#allocation12 + $0x38] sm:$0xff] %v962
      %1084 = vst [vmem:[#allocation12 + $0x40] sm:$0xff] %v965
      %1085 = vst [vmem:[#allocation12 + $0x48] sm:$0xff] %v967
      %1086 = vst [vmem:[#allocation12 + $0x50] sm:$0xff] %v970
      %1087 = vst [vmem:[#allocation12 + $0x58] sm:$0xff] %v972
      %1088 = vst [vmem:[#allocation12 + $0x60] sm:$0xff] %v975
      %1089 = vst [vmem:[#allocation12 + $0x68] sm:$0xff] %v977
      %1090 = vst [vmem:[#allocation12 + $0x70] sm:$0xff] %v980
      %1091 = vst [vmem:[#allocation12 + $0x78] sm:$0xff] %v982
      %1092 = vst [vmem:[#allocation12 + $0x80] sm:$0xff] %v1037
      %1093 = vst [vmem:[#allocation12 + $0x88] sm:$0xff] %v1039
      %1094 = vst [vmem:[#allocation12 + $0x90] sm:$0xff] %v1042
      %1095 = vst [vmem:[#allocation12 + $0x98] sm:$0xff] %v1044
      %1096 = vst [vmem:[#allocation12 + $0xa0] sm:$0xff] %v1047
      %1097 = vst [vmem:[#allocation12 + $0xa8] sm:$0xff] %v1049
      %1098 = vst [vmem:[#allocation12 + $0xb0] sm:$0xff] %v1052
      %1099 = vst [vmem:[#allocation12 + $0xb8] sm:$0xff] %v1054
      %1100 = vst [vmem:[#allocation12 + $0xc0] sm:$0xff] %v1057
      %1101 = vst [vmem:[#allocation12 + $0xc8] sm:$0xff] %v1059
      %1102 = vst [vmem:[#allocation12 + $0xd0] sm:$0xff] %v1062
      %1103 = vst [vmem:[#allocation12 + $0xd8] sm:$0xff] %v1064
      %1104 = vst [vmem:[#allocation12 + $0xe0] sm:$0xff] %v1067
      %1105 = vst [vmem:[#allocation12 + $0xe8] sm:$0xff] %v1069
      %1106 = vst [vmem:[#allocation12 + $0xf0] sm:$0xff] %v1072
      %1107 = vst [vmem:[#allocation12 + $0xf8] sm:$0xff] %v1074
    $region45: #{tpu_custom_call.1} parent=1 // pred_fallthru
      _
    // Predicated region
    $region46: #{tpu_custom_call.1} parent=1 // pred_check
      _
    $region47: #{tpu_custom_call.1} parent=1 // pred_check_branch
      %1109 = sbr.rel (0) target = $region49
    $region48: #{tpu_custom_call.1} parent=1 // pred_region
      %1111 = vsyncadd [#allocation5], 0
      %s1112 = sshll.u32 [#allocation11], 4
      %s1113 = int_to_ptr.vmem [resolvable:$true] %s1112
      %s1114 = sshll.u32 %s5, 4
      %s1115 = int_to_ptr.hbm [resolvable:$true] %s1114
      %1120 = dma.vmem_to_hbm [thread:$0]  %s1113, 256, %s1115, [#allocation5], 128, 128, 8
    $region49: #{tpu_custom_call.1} parent=1 // pred_fallthru
      _
    // Predicated region
    $region50: #{tpu_custom_call.1} parent=1 // pred_check
      _
    $region51: #{tpu_custom_call.1} parent=1 // pred_check_branch
      %1122 = sbr.rel (0) target = $region53
    $region52: #{tpu_custom_call.1} parent=1 // pred_region
      %1124 = vsyncadd [#allocation13], 0
      %s1125 = sshll.u32 [#allocation12], 4
      %s1126 = int_to_ptr.vmem [resolvable:$true] %s1125
      %s1127 = sshll.u32 %s6, 4
      %s1128 = int_to_ptr.hbm [resolvable:$true] %s1127
      %1133 = dma.vmem_to_hbm [thread:$0]  %s1126, 4096, %s1128, [#allocation13], 128, 128, 8
    $region53: #{tpu_custom_call.1} parent=1 // pred_fallthru
      _
    // Predicated region
    $region54: #{tpu_custom_call.1} parent=1 // pred_check
      _
    $region55: #{tpu_custom_call.1} parent=1 // pred_check_branch
      %1135 = sbr.rel (0) target = $region57
    $region56: #{tpu_custom_call.1} parent=1 // pred_region
      %1137 = dma.done [#allocation5], 256
    $region57: #{tpu_custom_call.1} parent=1 // pred_fallthru
      _
    // Predicated region
    $region58: #{tpu_custom_call.1} parent=1 // pred_check
      _
    $region59: #{tpu_custom_call.1} parent=1 // pred_check_branch
      %1139 = sbr.rel (0) target = $region61
    $region60: #{tpu_custom_call.1} parent=1 // pred_region
      %1141 = dma.done [#allocation13], 4096
    $region61: #{tpu_custom_call.1} parent=1 // pred_fallthru
      _
    %1142 = vsyncpa [#allocation4], 1
    %1143 = vsyncpa [#allocation7], 1
    %1144 = vsyncpa [#allocation10], 1
    %1145 = vsyncpa [#allocation5], 1
    %1146 = vsyncpa [#allocation13], 1

</llo_original>
